<compile_context>
chip_gen: v7x
topology: tpu7x:2x2x1
jax: 0.10.0
libtpu: 0.0.40
codegen_flags: <defaults>
</compile_context>

<pallas_src>
import functools

import jax
import jax.numpy as jnp
from jax.experimental import pallas as pl
from jax.experimental.pallas import tpu as pltpu

TAU = 0.95
EPS = 1e-12          # matches torch.nn.functional.normalize default eps
_NEG_BIG = -1e30     # mask value for padded (non-existent) color columns
_OUT_LANES = 128     # lane-dense per-tile partial-sum output width


def _round_up(v, m):
    return (v + m - 1) // m * m


def _color_loss_kernel(x_ref, embt_ref, tgt_ref, out_ref, *,
                       n_valid, c_valid, tn, inv_tau, mask_cols, mask_rows):
    """One row-tile: per-row infoNCE losses summed into a lane-dense (1,128) partial.

    x_ref    : (TN, D)   input embeddings (any float dtype; math in f32)
    embt_ref : (D, Cp)   pre-transposed color table (bf16); columns >= c_valid are pad
    tgt_ref  : (TN, 1)   int32 target color index per row
    out_ref  : (1, 128)  f32 partial sum of losses for this tile (broadcast over lanes)
    """
    i = pl.program_id(0)

    x = x_ref[...].astype(jnp.float32)                                     # (TN, D)
    tgt = tgt_ref[...]                                                     # (TN, 1)

    # F.normalize(x, dim=-1) fused with the 1/tau logit scale (f32 math, EUP rsqrt):
    sumsq = jnp.sum(x * x, axis=-1, keepdims=True)                         # (TN, 1)
    scale = jax.lax.rsqrt(jnp.maximum(sumsq, jnp.float32(EPS * EPS)))
    xs = (x * (scale * jnp.float32(inv_tau))).astype(embt_ref.dtype)       # bf16 MXU operand

    # logits = normalize(x) @ emb.T / tau  (bf16 x bf16 -> f32 accumulate on the MXU)
    logits = jnp.dot(xs, embt_ref[...], preferred_element_type=jnp.float32)  # (TN, Cp)

    rows, cp = logits.shape
    col_ids = jax.lax.broadcasted_iota(jnp.int32, (rows, cp), 1)
    if mask_cols:                               # only when the table was column-padded
        logits = jnp.where(col_ids < c_valid, logits, jnp.float32(_NEG_BIG))

    # cross_entropy(reduction='none') = logsumexp(logits) - logits[target].
    # Logits are bounded by 1/tau after L2 normalization -> no max-subtraction needed;
    # padded columns at -1e30 underflow to exp = 0.
    lse = jnp.log(jnp.sum(jnp.exp(logits), axis=-1, keepdims=True))        # (TN, 1)
    tgt_logit = jnp.sum(jnp.where(col_ids == tgt, logits, 0.0),
                        axis=-1, keepdims=True)                            # (TN, 1)
    loss = lse - tgt_logit                                                 # (TN, 1)

    def _write(per_row):
        part = jnp.sum(per_row, axis=0, keepdims=True)                     # (1, 1)
        out_ref[...] = jnp.broadcast_to(part, out_ref.shape)               # lane-dense store

    if mask_rows:
        last = pl.num_programs(0) - 1

        @pl.when(i == last)
        def _():
            row_ids = i * tn + jax.lax.broadcasted_iota(jnp.int32, (rows, 1), 0)
            _write(jnp.where(row_ids < n_valid, loss, jnp.float32(0.0)))

        @pl.when(i != last)
        def _():
            _write(loss)
    else:
        _write(loss)


def color_loss(x, all_embeddings, target_indices, *, tau=TAU, tn=1024,
               mxu_dtype=jnp.bfloat16):
    """Pallas equivalent of colorLoss.forward(x, x_names) -> scalar mean infoNCE loss.

    x:               (N, D) float (f32 or bf16; bf16 halves the dominant HBM read)
    all_embeddings:  (C, D) float, rows L2-normalized (as in colorLoss.__init__)
    target_indices:  (N,)   int  (index of each x_name in the color table)
    """
    n, d = x.shape
    c, d2 = all_embeddings.shape
    assert d == d2, "embedding dim mismatch"

    # Lane-dense padded class count (tiny, one-time); the big x array is never padded.
    c_pad = _round_up(max(c, 128), 128)

    # Row tile: multiple of 8, or the whole array if it fits in one tile.
    if tn >= n:
        tn_eff = n
    else:
        tn_eff = max((tn // 8) * 8, 8)
    num_tiles = -(-n // tn_eff)
    mask_rows = (n % tn_eff) != 0
    mask_cols = c_pad != c

    # One-time, loop-invariant prep of the tiny color table: transpose, pad cols, bf16.
    emb_t = all_embeddings.astype(jnp.float32).T                       # (D, C)
    if mask_cols:
        emb_t = jnp.pad(emb_t, ((0, 0), (0, c_pad - c)))
    emb_t = emb_t.astype(mxu_dtype)                                    # (D, Cp)

    tgt = target_indices.astype(jnp.int32).reshape(n, 1)

    kernel = functools.partial(
        _color_loss_kernel,
        n_valid=n, c_valid=c, tn=tn_eff, inv_tau=1.0 / float(tau),
        mask_cols=mask_cols, mask_rows=mask_rows,
    )

    # VMEM budget: double-buffered input blocks ((tn,1) blocks lane-pad to (tn,128) words)
    # plus in-kernel f32 temporaries (x upcast, a few logits-sized passes).
    x_blk = tn_eff * d * jnp.dtype(x.dtype).itemsize
    emb_blk = d * c_pad * jnp.dtype(mxu_dtype).itemsize
    tgt_blk = tn_eff * 128 * 4
    out_blk = 8 * 128 * 4
    tmp = 2 * tn_eff * d * 4 + 3 * tn_eff * c_pad * 4
    work = 2 * (x_blk + emb_blk + tgt_blk + out_blk) + tmp

    vmem_cap = 128 * 1024 * 1024
    try:
        vmem_cap = int(getattr(pltpu.get_tpu_info(), "vmem_capacity_bytes", vmem_cap))
    except Exception:
        pass
    ceiling = (vmem_cap * 3) // 4          # never request the full VMEM (v7x: 64 MiB/TC)
    vmem_limit = int(min(max(2 * work, 32 * 1024 * 1024), ceiling))

    partials = pl.pallas_call(
        kernel,
        out_shape=jax.ShapeDtypeStruct((num_tiles, _OUT_LANES), jnp.float32),
        grid=(num_tiles,),
        in_specs=[
            pl.BlockSpec((tn_eff, d), lambda i: (i, 0)),       # x rows (pipelined)
            pl.BlockSpec((d, c_pad), lambda i: (0, 0)),        # color table (resident)
            pl.BlockSpec((tn_eff, 1), lambda i: (i, 0)),       # targets
        ],
        out_specs=pl.BlockSpec((1, _OUT_LANES), lambda i: (i, 0)),  # per-tile partial sum
        compiler_params=pltpu.CompilerParams(
            dimension_semantics=("parallel",),
            vmem_limit_bytes=vmem_limit,
        ),
        cost_estimate=pl.CostEstimate(
            flops=int(2 * n * d * c_pad + 5 * n * d),
            transcendentals=int(n * c_pad + 2 * n),
            bytes_accessed=int(
                n * d * jnp.dtype(x.dtype).itemsize
                + d * c_pad * jnp.dtype(mxu_dtype).itemsize
                + n * 4
                + num_tiles * _OUT_LANES * 4
            ),
        ),
    )(x, emb_t, tgt)

    return jnp.sum(partials[:, 0]) / jnp.float32(n)


def _reference(x, emb, tgt, tau=TAU):
    x = x.astype(jnp.float32)
    emb = emb.astype(jnp.float32)
    xn = x / jnp.maximum(jnp.linalg.norm(x, axis=-1, keepdims=True), EPS)
    logits = xn @ emb.T / tau
    lse = jax.scipy.special.logsumexp(logits, axis=-1)
    tgt_logit = jnp.take_along_axis(logits, tgt[:, None], axis=-1)[:, 0]
    return jnp.mean(lse - tgt_logit)


if __name__ == "__main__":
    key = jax.random.PRNGKey(0)
    k_x, k_emb, k_tgt = jax.random.split(key, 3)

    N, D, C = 8, 32, 16  # batch of embeddings, embedding dim, number of basic colors

    x = jax.random.normal(k_x, (N, D), dtype=jnp.float32)

    # Deterministic synthetic "basic_color_embeddings.csv": random rows, L2-normalized
    # (matches the row-normalization done in colorLoss.__init__).
    emb = jax.random.normal(k_emb, (C, D), dtype=jnp.float32)
    emb = emb / jnp.linalg.norm(emb, axis=-1, keepdims=True)

    # x_names -> target indices (name_to_index lookup is plain Python in torch; ints here).
    tgt = jax.random.randint(k_tgt, (N,), 0, C, dtype=jnp.int32)

    loss = color_loss(x, emb, tgt)
    jax.block_until_ready(loss)
    ref = _reference(x, emb, tgt)
    # bf16 MXU operands -> a few 1e-3 of absolute error vs. the pure-f32 reference.
    assert jnp.allclose(loss, ref, atol=3e-2, rtol=3e-2), (loss, ref)

    # Also exercise the multi-tile + partial-last-tile (row-masked) path at a tiny shape.
    N2 = 19
    x2 = jax.random.normal(jax.random.PRNGKey(1), (N2, D), dtype=jnp.float32)
    tgt2 = jax.random.randint(jax.random.PRNGKey(2), (N2,), 0, C, dtype=jnp.int32)
    loss2 = color_loss(x2, emb, tgt2, tn=8)
    jax.block_until_ready(loss2)
    ref2 = _reference(x2, emb, tgt2)
    assert jnp.allclose(loss2, ref2, atol=3e-2, rtol=3e-2), (loss2, ref2)

    print("KERNEL_OK")
</pallas_src>

<mosaic_0001>
module attributes {stable_mosaic.version = 11 : i64} {
  func.func @_color_loss_kernel(%arg0: i32, %arg1: memref<8x32xf32, #tpu.memory_space<vmem>>, %arg2: memref<32x128xbf16, #tpu.memory_space<vmem>>, %arg3: memref<8x1xi32, #tpu.memory_space<vmem>>, %arg4: memref<1x128xf32, #tpu.memory_space<vmem>>) attributes {dimension_semantics = [#tpu.dimension_semantics<parallel>], iteration_bounds = array<i64: 1>, scalar_prefetch = 0 : i64, scratch_operands = 0 : i64, tpu.core_type = #tpu.core_type<tc>, window_params = [{transform_indices = @transform_0, window_bounds = array<i64: 8, 32>}, {pipeline_mode = #tpu.pipeline_mode<synchronous>, transform_indices = @transform_1, window_bounds = array<i64: 32, 128>}, {transform_indices = @transform_2, window_bounds = array<i64: 8, 1>}, {transform_indices = @transform_3, window_bounds = array<i64: 1, 128>}]} {
    %c0 = arith.constant 0 : index
    %c0_0 = arith.constant 0 : index
    %0 = vector.load %arg1[%c0, %c0_0] : memref<8x32xf32, #tpu.memory_space<vmem>>, vector<8x32xf32>
    %c0_1 = arith.constant 0 : index
    %c0_2 = arith.constant 0 : index
    %1 = vector.load %arg3[%c0_1, %c0_2] : memref<8x1xi32, #tpu.memory_space<vmem>>, vector<8x1xi32>
    %2 = arith.mulf %0, %0 : vector<8x32xf32>
    %cst = arith.constant dense<0.000000e+00> : vector<8xf32>
    %3 = vector.multi_reduction <add>, %2, %cst [1] : vector<8x32xf32> to vector<8xf32>
    %4 = vector.shape_cast %3 : vector<8xf32> to vector<8x1xf32>
    %cst_3 = arith.constant 1.000000e-24 : f32
    %5 = vector.broadcast %cst_3 : f32 to vector<8x1xf32>
    %6 = arith.maximumf %4, %5 : vector<8x1xf32>
    %7 = math.rsqrt %6 : vector<8x1xf32>
    %cst_4 = arith.constant 1.05263162 : f32
    %8 = vector.broadcast %cst_4 : f32 to vector<8x1xf32>
    %9 = arith.mulf %7, %8 : vector<8x1xf32>
    %10 = vector.broadcast %9 : vector<8x1xf32> to vector<8x32xf32>
    %11 = arith.mulf %0, %10 : vector<8x32xf32>
    %12 = arith.truncf %11 : vector<8x32xf32> to vector<8x32xbf16>
    %c0_5 = arith.constant 0 : index
    %c0_6 = arith.constant 0 : index
    %13 = vector.load %arg2[%c0_5, %c0_6] : memref<32x128xbf16, #tpu.memory_space<vmem>>, vector<32x128xbf16>
    %cst_7 = arith.constant dense<0.000000e+00> : vector<8x128xf32>
    %14 = tpu.matmul %12, %13, %cst_7 {dimension_numbers = #tpu.dot_dimension_numbers<[1], [0], [0], [1], [0, 0, 1, 1], [], []>} : vector<8x32xbf16>, vector<32x128xbf16>, vector<8x128xf32> -> vector<8x128xf32>
    %15 = tpu.iota {dimensions = array<i32: 1>} : vector<8x128xi32>
    %c16_i32 = arith.constant 16 : i32
    %16 = vector.broadcast %c16_i32 : i32 to vector<8x128xi32>
    %17 = arith.cmpi slt, %15, %16 : vector<8x128xi32>
    %cst_8 = arith.constant -1.000000e+30 : f32
    %18 = vector.broadcast %cst_8 : f32 to vector<8x128xf32>
    %19 = arith.select %17, %14, %18 : vector<8x128xi1>, vector<8x128xf32>
    %20 = math.exp %19 : vector<8x128xf32>
    %cst_9 = arith.constant dense<0.000000e+00> : vector<8xf32>
    %21 = vector.multi_reduction <add>, %20, %cst_9 [1] : vector<8x128xf32> to vector<8xf32>
    %22 = vector.shape_cast %21 : vector<8xf32> to vector<8x1xf32>
    %23 = math.log %22 : vector<8x1xf32>
    %24 = vector.broadcast %1 : vector<8x1xi32> to vector<8x128xi32>
    %25 = arith.cmpi eq, %15, %24 : vector<8x128xi32>
    %cst_10 = arith.constant 0.000000e+00 : f32
    %26 = vector.broadcast %cst_10 : f32 to vector<8x128xf32>
    %27 = arith.select %25, %19, %26 : vector<8x128xi1>, vector<8x128xf32>
    %cst_11 = arith.constant dense<0.000000e+00> : vector<8xf32>
    %28 = vector.multi_reduction <add>, %27, %cst_11 [1] : vector<8x128xf32> to vector<8xf32>
    %29 = vector.shape_cast %28 : vector<8xf32> to vector<8x1xf32>
    %30 = arith.subf %23, %29 : vector<8x1xf32>
    %cst_12 = arith.constant dense<0.000000e+00> : vector<1xf32>
    %31 = vector.multi_reduction <add>, %30, %cst_12 [0] : vector<8x1xf32> to vector<1xf32>
    %32 = vector.shape_cast %31 : vector<1xf32> to vector<1x1xf32>
    %33 = vector.shape_cast %32 : vector<1x1xf32> to vector<1x1xf32>
    %34 = vector.broadcast %33 : vector<1x1xf32> to vector<1x128xf32>
    %c0_13 = arith.constant 0 : index
    %c0_14 = arith.constant 0 : index
    %35 = vector.load %arg4[%c0_13, %c0_14] : memref<1x128xf32, #tpu.memory_space<vmem>>, vector<1x128xf32>
    tpu.vector_store %arg4[%c0_13, %c0_14], %34 {strides = array<i32>} : memref<1x128xf32, #tpu.memory_space<vmem>>, vector<1x128xf32>,
    return
  }
  func.func @transform_0(%arg0: i32) -> (i32, i32) {
    %c0_i32 = arith.constant 0 : i32
    %c0_i32_0 = arith.constant 0 : i32
    return %arg0, %c0_i32 : i32, i32
  }
  func.func @transform_1(%arg0: i32) -> (i32, i32) {
    %c0_i32 = arith.constant 0 : i32
    %c0_i32_0 = arith.constant 0 : i32
    %c0_i32_1 = arith.constant 0 : i32
    return %c0_i32, %c0_i32_0 : i32, i32
  }
  func.func @transform_2(%arg0: i32) -> (i32, i32) {
    %c0_i32 = arith.constant 0 : i32
    %c0_i32_0 = arith.constant 0 : i32
    return %arg0, %c0_i32 : i32, i32
  }
  func.func @transform_3(%arg0: i32) -> (i32, i32) {
    %c0_i32 = arith.constant 0 : i32
    %c0_i32_0 = arith.constant 0 : i32
    return %arg0, %c0_i32 : i32, i32
  }
}

</mosaic_0001>

<llo_original>
// kernel: tpu_custom_call.1
$region0: #{tpu_custom_call.1}
  #allocation0 [shape = 'u32[]', space=smem, size = 0x4, offset = 0x4, fixed_abs, tag = 'smem constant byte address 0x4 - core index']
  #allocation1 [shape = 'u32[144,128]{1,0:T(1,128)}', space=vmem, size = 0x12000, scoped, tag = 'internal scratch']
  %s0 = inlined_call_operand.vmem [shape: f32[8,32], index: 0, kind: input, shape index: {}]
  %s1 = inlined_call_operand.hbm [shape: bf16[32,128], index: 1, kind: input, shape index: {}]
  %s2 = inlined_call_operand.vmem [shape: s32[8,1], index: 2, kind: input, shape index: {}]
  %s3 = inlined_call_operand.hbm [shape: f32[1,128], index: 3, kind: output, shape index: {}]
  %s4 = sld [smem:[#allocation0]]
  $region26: #{tpu_custom_call.1} parent=0
    _
  %s6 = ssub.s32 1, %s4
  %s7 = scalar_select 0, %s6, %s4
  $region1: #{tpu_custom_call.1} parent=0
    #allocation2 [shape = 'u8[8192]{0}', space=vmem, size = 0x2000, scoped, tag = 'input window, operand 1, single buffered']
    #allocation3 [shape = 's32[1]{0}', space=sflag, size = 0x4, scoped, tag = 'scoped memory for tpu_custom_call.1']
    #allocation4 [shape = 's32[1]{0}', space=sflag, size = 0x4, scoped, tag = 'scoped memory for tpu_custom_call.1']
    #allocation5 [shape = 'u8[512]{0}', space=vmem, size = 0x400, scoped, tag = 'output window, operand 0, single buffered']
    %8 = vsyncpa [#allocation3], 0
    %9 = vsyncpa [#allocation4], 0
    // Predicated region
    $region2: #{tpu_custom_call.1} parent=1 // pred_check
      _
    $region3: #{tpu_custom_call.1} parent=1 // pred_check_branch
      %11 = sbr.rel (0) target = $region5
    $region4: #{tpu_custom_call.1} parent=1 // pred_region
      _
    $region5: #{tpu_custom_call.1} parent=1 // pred_fallthru
      _
    // Predicated region
    $region6: #{tpu_custom_call.1} parent=1 // pred_check
      _
    $region7: #{tpu_custom_call.1} parent=1 // pred_check_branch
      %13 = sbr.rel (0) target = $region9
    $region8: #{tpu_custom_call.1} parent=1 // pred_region
      %s15 = ssub.s32 256, 256
      %16 = vsyncadd [#allocation3], %s15
      %s17 = sshll.u32 [#allocation2], 4
      %s18 = int_to_ptr.vmem [resolvable:$true] %s17
      %23 = dma.hbm_to_vmem [thread:$0]  %s1, 256, %s18, [#allocation3], 64, 64, 4
    $region9: #{tpu_custom_call.1} parent=1 // pred_fallthru
      _
    // Predicated region
    $region10: #{tpu_custom_call.1} parent=1 // pred_check
      _
    $region11: #{tpu_custom_call.1} parent=1 // pred_check_branch
      %25 = sbr.rel (0) target = $region13
    $region12: #{tpu_custom_call.1} parent=1 // pred_region
      _
    $region13: #{tpu_custom_call.1} parent=1 // pred_fallthru
      _
    // Predicated region
    $region14: #{tpu_custom_call.1} parent=1 // pred_check
      _
    $region15: #{tpu_custom_call.1} parent=1 // pred_check_branch
      %27 = sbr.rel (0) target = $region17
    $region16: #{tpu_custom_call.1} parent=1 // pred_region
      %28 = dma.done [#allocation3], 256
    $region17: #{tpu_custom_call.1} parent=1 // pred_fallthru
      _
    %v30 = vld [vmem:[%s0] sm:$0xff]
    %v31 = vld [vmem:[%s2] sm:$0xff]
    %v32 = vmul.f32 %v30, %v30
    %vm33 = vcmask 261120
    %v34 = vsel %vm33, %v32, 0.0
    %35 = vadd.xlane.f32.xlu0 %v34
    %v36 = vpop.xlane.xlu0 %35
    %v37 = vmax.f32 %v36, 1e-24
    %v38 = vrsqrt.pop %v37
    %v39 = vmul.f32 %v38, 1.0526316
    %v40 = vmul.f32 %v30, %v39
    %v41 = vpack.c.bf16 %v40, %v40
    %v42 = vld [vmem:[#allocation2] sm:$0xf]
    %v43 = vld [vmem:[#allocation2 + $0x4] sm:$0xf]
    %v44 = vld [vmem:[#allocation2 + $0x8] sm:$0xf]
    %v45 = vld [vmem:[#allocation2 + $0xc] sm:$0xf]
    %v50 = vunpack.c.l.b16 %v42
    %v51 = vunpack.c.l.b16 %v43
    %v52 = vunpack.c.l.b16 %v44
    %v53 = vunpack.c.l.b16 %v45
    %v54 = vpack.c.b16 %v51, %v50
    %v55 = vpack.c.b16 %v53, %v52
    %v59 = vsel %vm33, %v41, 0
    %61 = vmatprep.subr.bf16.mxu0 0
    %62 = vmatpush1.bf16.msra.mxu0 %v54
    %63 = vmatprep.subr.bf16.mxu0 0
    %64 = vmatpush1.bf16.msra.mxu0 %v55
    %65 = vmatprep.subr.bf16.mxu0 0
    %66 = vmatpush1.bf16.msra.mxu0 0
    %67 = vmatprep.subr.bf16.mxu0 0
    %68 = vmatpush1.bf16.msra.mxu0 0
    %69 = vmatprep.subr.bf16.mxu0 0
    %70 = vmatpush1.bf16.msra.mxu0 0
    %71 = vmatprep.subr.bf16.mxu0 0
    %72 = vmatpush1.bf16.msra.mxu0 0
    %73 = vmatprep.subr.bf16.mxu0 0
    %74 = vmatpush1.bf16.msra.mxu0 0
    %75 = vmatprep.subr.bf16.mxu0 0
    %76 = vmatpush1.bf16.msra.mxu0 0
    %77 = vmatprep.subr.bf16.mxu0 0
    %78 = vmatpush1.bf16.msra.mxu0 0
    %79 = vmatprep.subr.bf16.mxu0 0
    %80 = vmatpush1.bf16.msra.mxu0 0
    %81 = vmatprep.subr.bf16.mxu0 0
    %82 = vmatpush1.bf16.msra.mxu0 0
    %83 = vmatprep.subr.bf16.mxu0 0
    %84 = vmatpush1.bf16.msra.mxu0 0
    %85 = vmatprep.subr.bf16.mxu0 0
    %86 = vmatpush1.bf16.msra.mxu0 0
    %87 = vmatprep.subr.bf16.mxu0 0
    %88 = vmatpush1.bf16.msra.mxu0 0
    %89 = vmatprep.subr.bf16.mxu0 0
    %90 = vmatpush1.bf16.msra.mxu0 0
    %91 = vmatprep.subr.bf16.mxu0 0
    %92 = vmatpush1.bf16.msra.mxu0 0
    %93 = vmatprep.mubr.bf16.mxu0 0
    %94 = vmatmul.mubr.bf16.gmra.mrb[0].mxu0 %v59
    %v95 = vpop.f32.mrb[0].mxu0
    %v96 = vadd.f32 0.0, %v95
    %v97 = vpop.f32.mrb[0].mxu0
    %v98 = vpop.f32.mrb[0].mxu0
    %v99 = vpop.f32.mrb[0].mxu0
    %100 = vdwg.mxu0
    %v101 = vlaneseq
    %v102 = vand.u32 %v101, 127
    %vm103 = vcmp.lt.s32.totalorder %v102, 16
    %v104 = vsel %vm103, %v96, -1e+30
    %v105 = vmul.f32 %v104, 1.442695
    %v106 = vpow.pop %v105
    %107 = vadd.xlane.f32.xlu0 %v106
    %v108 = vpop.xlane.xlu0 %107
    %v109 = vlog2.pop %v108
    %v110 = vmul.f32 %v109, 0.6931472
    %111 = vset.pattern.permute.xlu0 0
    %112 = vperm.xlu0 %111, %v31
    %v113 = vpop.permute.xlu0 %112
    %vm114 = vcmp.eq.s32.totalorder %v102, %v113
    %v115 = vsel %vm114, %v104, 0.0
    %116 = vadd.xlane.f32.xlu0 %v115
    %v117 = vpop.xlane.xlu0 %116
    %v118 = vsub.f32 %v110, %v117
    %v119 = vrot.slane %v118, 4
    %v120 = vadd.f32 %v118, %v119
    %v121 = vrot.slane %v120, 2
    %v122 = vadd.f32 %v120, %v121
    %v123 = vrot.slane %v122, 1
    %v124 = vadd.f32 %v122, %v123
    %125 = vst [vmem:[#allocation5] sm:$0x1] %v124
    // Predicated region
    $region18: #{tpu_custom_call.1} parent=1 // pred_check
      _
    $region19: #{tpu_custom_call.1} parent=1 // pred_check_branch
      %127 = sbr.rel (0) target = $region21
    $region20: #{tpu_custom_call.1} parent=1 // pred_region
      %s129 = ssub.s32 16, 16
      %130 = vsyncadd [#allocation4], %s129
      %s132 = sshll.u32 [#allocation5], 4
      %s133 = int_to_ptr.vmem [resolvable:$true] %s132
      %135 = dma.vmem_to_hbm [thread:$0]  %s133, 16, %s3, [#allocation4]
    $region21: #{tpu_custom_call.1} parent=1 // pred_fallthru
      _
    // Predicated region
    $region22: #{tpu_custom_call.1} parent=1 // pred_check
      _
    $region23: #{tpu_custom_call.1} parent=1 // pred_check_branch
      %137 = sbr.rel (0) target = $region25
    $region24: #{tpu_custom_call.1} parent=1 // pred_region
      %138 = dma.done [#allocation4], 16
    $region25: #{tpu_custom_call.1} parent=1 // pred_fallthru
      _
    %139 = vsyncpa [#allocation3], 1
    %140 = vsyncpa [#allocation4], 1

</llo_original>
